<compile_context>
chip_gen: v5e
topology: v5e:2x2
jax: 0.10.0
libtpu: 0.0.40
codegen_flags: <defaults>
</compile_context>

<pallas_src>
import functools

import jax
import jax.numpy as jnp
from jax.experimental import pallas as pl
from jax.experimental.pallas import tpu as pltpu


def _round_up(x, m):
    return ((x + m - 1) // m) * m


# ---------------------------------------------------------------------------
# Kernel: one batch tile; weights resident in VMEM across the whole grid.
# ---------------------------------------------------------------------------
def senet_kernel(x_ref, w1_ref, b1_ref, w2_ref, b2_ref, o_ref):
    # fc1 (+ folded bn1): bf16 MXU operands, f32 accumulate.
    h = jnp.dot(x_ref[...].astype(jnp.bfloat16), w1_ref[...],
                preferred_element_type=jnp.float32)          # [TB, Hp]
    h = jnp.maximum(h + b1_ref[...], 0.0)

    # fc2 (+ folded bn2, pre-scaled by 0.5 for the tanh identity).
    z = jnp.dot(h.astype(jnp.bfloat16), w2_ref[...],
                preferred_element_type=jnp.float32)          # [TB, D]
    z = z + b2_ref[...]

    # 2*sigmoid(2z) == 1 + tanh(z): one EUP op, no explicit *2 on the VALU.
    gate = 1.0 + jnp.tanh(z)
    o_ref[...] = (gate * x_ref[...].astype(jnp.float32)).astype(o_ref.dtype)


# ---------------------------------------------------------------------------
# One-time parameter preparation (fold BN + bias + 0.5, transpose, pad, cast).
# ---------------------------------------------------------------------------
def prepare_senet_params(params, use_bn=True, eps=1e-5,
                         weight_dtype=jnp.bfloat16):
    w1 = params["fc1_w"].astype(jnp.float32)   # [H, D]
    b1 = params["fc1_b"].astype(jnp.float32)   # [H]
    w2 = params["fc2_w"].astype(jnp.float32)   # [D, H]
    b2 = params["fc2_b"].astype(jnp.float32)   # [D]
    H, D = w1.shape

    if use_bn:
        s1 = params["bn1_gamma"] / jnp.sqrt(params["bn1_var"] + eps)
        t1 = params["bn1_beta"] - params["bn1_mean"] * s1
        s2 = params["bn2_gamma"] / jnp.sqrt(params["bn2_var"] + eps)
        t2 = params["bn2_beta"] - params["bn2_mean"] * s2
    else:
        s1 = jnp.ones((H,), jnp.float32)
        t1 = jnp.zeros((H,), jnp.float32)
        s2 = jnp.ones((D,), jnp.float32)
        t2 = jnp.zeros((D,), jnp.float32)

    # Eval-mode BN fold:  (x @ W^T + b) * s + t == x @ (W^T * s) + (b*s + t)
    w1f = w1.T * s1[None, :]                   # [D, H]
    b1f = b1 * s1 + t1                         # [H]
    # Fold the 0.5 of  2*sigmoid(z) = 1 + tanh(z/2)  into fc2 (exact in bf16).
    w2f = 0.5 * (w2.T * s2[None, :])           # [H, D]
    b2f = 0.5 * (b2 * s2 + t2)                 # [D]

    # Pad ONLY the hidden dim to a 128 multiple (weights only, one-time).
    # Padded columns give h = relu(0) = 0 and padded rows of W2' are 0, so
    # they contribute nothing.  x / y keep their true (B, D) shape.
    Hp = _round_up(H, 128)
    w1p = jnp.zeros((D, Hp), jnp.float32).at[:, :H].set(w1f).astype(weight_dtype)
    w2p = jnp.zeros((Hp, D), jnp.float32).at[:H, :].set(w2f).astype(weight_dtype)
    b1p = jnp.zeros((1, Hp), jnp.float32).at[0, :H].set(b1f)
    b2p = b2f.reshape(1, D)

    return {"w1": w1p, "b1": b1p, "w2": w2p, "b2": b2p}


# ---------------------------------------------------------------------------
# Per-generation VMEM limit and batch-tile selection.
# ---------------------------------------------------------------------------
@functools.lru_cache(maxsize=1)
def _vmem_limit_bytes():
    # ~80% of per-core VMEM: ~51 MiB on v7x (64 MiB), ~102 MiB on v5e/v6e (128 MiB).
    try:
        cap = pltpu.get_tpu_info().vmem_capacity_bytes
        return int(max(32 << 20, min(int(cap * 0.8), 112 << 20)))
    except Exception:
        return 48 << 20


def _pick_batch_tile(B, D, Hp, x_itemsize, w_itemsize, vmem_limit, block_b):
    # Dtype-native sublane packing: 8 (f32), 16 (bf16), 32 (int8/fp8).
    packing = max(8, 32 // x_itemsize)
    weight_bytes = 2 * D * Hp * w_itemsize + (Hp + D) * 4       # single-buffered
    budget = max(vmem_limit - weight_bytes - (8 << 20), 2 << 20)
    per_row = (4 * D * x_itemsize        # x + y tiles, double-buffered
               + 4 * (D + Hp)            # f32 intermediates (h, z/gate)
               + 2 * (D + Hp))           # bf16 copies fed to the MXU
    tb = max(packing, (budget // per_row) // packing * packing)
    tb = min(tb, _round_up(block_b, packing))
    # Keep >= 2 grid steps when the batch allows it so the "parallel" axis
    # actually splits across both TensorCores on v7x.
    tb = min(tb, _round_up(pl.cdiv(B, 2), packing))
    if tb >= B:
        tb = B
    return tb


def _resident_spec(shape):
    ndim = len(shape)
    idx = lambda i, _n=ndim: (0,) * _n
    try:
        # Grid-invariant operand: fetched once, never revisited -> 1 buffer.
        return pl.BlockSpec(shape, idx, pipeline_mode=pl.Buffered(1))
    except Exception:
        return pl.BlockSpec(shape, idx)


# ---------------------------------------------------------------------------
# Forward: grid over batch, resident weights, pipelined x/out tiles.
# ---------------------------------------------------------------------------
@functools.partial(jax.jit, static_argnames=("block_b",))
def senet_forward(x, prepared, block_b=1024):
    B, D = x.shape
    Dw, Hp = prepared["w1"].shape
    assert Dw == D, "prepared params do not match x's feature dim"

    x_itemsize = jnp.dtype(x.dtype).itemsize
    w_itemsize = jnp.dtype(prepared["w1"].dtype).itemsize
    vmem_limit = _vmem_limit_bytes()
    TB = _pick_batch_tile(B, D, Hp, x_itemsize, w_itemsize, vmem_limit, block_b)
    grid = (pl.cdiv(B, TB),)

    cost = pl.CostEstimate(
        flops=4 * B * D * Hp,                              # two matmuls
        transcendentals=B * D,                             # tanh gate
        bytes_accessed=(2 * B * D * x_itemsize             # x read + y write
                        + 2 * D * Hp * w_itemsize          # W1' + W2'
                        + (Hp + D) * 4),                   # biases
    )

    return pl.pallas_call(
        senet_kernel,
        out_shape=jax.ShapeDtypeStruct((B, D), x.dtype),   # true shape: no pad/slice
        grid=grid,
        in_specs=[
            pl.BlockSpec((TB, D), lambda i: (i, 0)),       # x tile (pipelined)
            _resident_spec((D, Hp)),                       # W1' (BN folded)
            _resident_spec((1, Hp)),                       # b1'
            _resident_spec((Hp, D)),                       # W2' (BN + 0.5 folded)
            _resident_spec((1, D)),                        # b2'
        ],
        out_specs=pl.BlockSpec((TB, D), lambda i: (i, 0)),
        compiler_params=pltpu.CompilerParams(
            dimension_semantics=("parallel",),             # v7x: shard batch over 2 TCs
            vmem_limit_bytes=vmem_limit,
        ),
        cost_estimate=cost,
    )(x, prepared["w1"], prepared["b1"], prepared["w2"], prepared["b2"])


# ---------------------------------------------------------------------------
# Init + pure-JAX reference (PyTorch eval-mode semantics, f32 throughout).
# ---------------------------------------------------------------------------
def init_params(key, input_dim, reduction, use_bn):
    hidden_dim = input_dim // reduction
    k1, k2, k3, k4 = jax.random.split(key, 4)
    lim1 = 1.0 / jnp.sqrt(input_dim)
    lim2 = 1.0 / jnp.sqrt(hidden_dim)
    params = {
        "fc1_w": jax.random.uniform(k1, (hidden_dim, input_dim), jnp.float32, -lim1, lim1),
        "fc1_b": jax.random.uniform(k2, (hidden_dim,), jnp.float32, -lim1, lim1),
        "fc2_w": jax.random.uniform(k3, (input_dim, hidden_dim), jnp.float32, -lim2, lim2),
        "fc2_b": jax.random.uniform(k4, (input_dim,), jnp.float32, -lim2, lim2),
    }
    if use_bn:
        params.update({
            "bn1_gamma": jnp.ones((hidden_dim,), jnp.float32),
            "bn1_beta":  jnp.zeros((hidden_dim,), jnp.float32),
            "bn1_mean":  jnp.zeros((hidden_dim,), jnp.float32),
            "bn1_var":   jnp.ones((hidden_dim,), jnp.float32),
            "bn2_gamma": jnp.ones((input_dim,), jnp.float32),
            "bn2_beta":  jnp.zeros((input_dim,), jnp.float32),
            "bn2_mean":  jnp.zeros((input_dim,), jnp.float32),
            "bn2_var":   jnp.ones((input_dim,), jnp.float32),
        })
    return params


def senet_reference(x, params, use_bn=True, eps=1e-5):
    h = x @ params["fc1_w"].T + params["fc1_b"]
    if use_bn:
        h = (h - params["bn1_mean"]) / jnp.sqrt(params["bn1_var"] + eps)
        h = h * params["bn1_gamma"] + params["bn1_beta"]
    h = jnp.maximum(h, 0.0)
    o = h @ params["fc2_w"].T + params["fc2_b"]
    if use_bn:
        o = (o - params["bn2_mean"]) / jnp.sqrt(params["bn2_var"] + eps)
        o = o * params["bn2_gamma"] + params["bn2_beta"]
    o = jax.nn.sigmoid(o)
    return 2.0 * o * x


if __name__ == "__main__":
    # TODO(synk): nn.Dropout is identity in eval mode; training-mode dropout
    # masks (pltpu.prng_*) are not implemented in the kernel.
    input_dim = 32
    reduction = 4
    use_bn = True
    batch = 8

    key = jax.random.PRNGKey(0)
    kx, kp = jax.random.split(key)
    x = jax.random.normal(kx, (batch, input_dim), dtype=jnp.float32)
    params = init_params(kp, input_dim, reduction, use_bn)
    prepared = prepare_senet_params(params, use_bn=use_bn)

    y = senet_forward(x, prepared)
    y = jax.block_until_ready(y)

    y_ref = senet_reference(x, params, use_bn=use_bn)
    assert y.shape == x.shape
    # bf16 MXU operands (f32 accumulate) loosen the tolerance vs the f32 reference.
    assert jnp.allclose(y, y_ref, atol=3e-2, rtol=3e-2), "mismatch vs reference"

    print("KERNEL_OK")
</pallas_src>

<mosaic_0001>
module attributes {stable_mosaic.version = 11 : i64} {
  func.func @senet_kernel(%arg0: i32, %arg1: memref<8x32xf32, #tpu.memory_space<vmem>>, %arg2: memref<32x128xbf16, #tpu.memory_space<vmem>>, %arg3: memref<1x128xf32, #tpu.memory_space<vmem>>, %arg4: memref<128x32xbf16, #tpu.memory_space<vmem>>, %arg5: memref<1x32xf32, #tpu.memory_space<vmem>>, %arg6: memref<8x32xf32, #tpu.memory_space<vmem>>) attributes {dimension_semantics = [#tpu.dimension_semantics<parallel>], iteration_bounds = array<i64: 1>, scalar_prefetch = 0 : i64, scratch_operands = 0 : i64, tpu.core_type = #tpu.core_type<tc>, window_params = [{transform_indices = @transform_0, window_bounds = array<i64: 8, 32>}, {pipeline_mode = #tpu.pipeline_mode<synchronous>, transform_indices = @transform_1, window_bounds = array<i64: 32, 128>}, {pipeline_mode = #tpu.pipeline_mode<synchronous>, transform_indices = @transform_2, window_bounds = array<i64: 1, 128>}, {pipeline_mode = #tpu.pipeline_mode<synchronous>, transform_indices = @transform_3, window_bounds = array<i64: 128, 32>}, {pipeline_mode = #tpu.pipeline_mode<synchronous>, transform_indices = @transform_4, window_bounds = array<i64: 1, 32>}, {transform_indices = @transform_5, window_bounds = array<i64: 8, 32>}]} {
    %c0 = arith.constant 0 : index
    %c0_0 = arith.constant 0 : index
    %0 = vector.load %arg1[%c0, %c0_0] : memref<8x32xf32, #tpu.memory_space<vmem>>, vector<8x32xf32>
    %1 = arith.truncf %0 : vector<8x32xf32> to vector<8x32xbf16>
    %c0_1 = arith.constant 0 : index
    %c0_2 = arith.constant 0 : index
    %2 = vector.load %arg2[%c0_1, %c0_2] : memref<32x128xbf16, #tpu.memory_space<vmem>>, vector<32x128xbf16>
    %cst = arith.constant dense<0.000000e+00> : vector<8x128xf32>
    %3 = tpu.matmul %1, %2, %cst {dimension_numbers = #tpu.dot_dimension_numbers<[1], [0], [0], [1], [0, 0, 1, 1], [], []>} : vector<8x32xbf16>, vector<32x128xbf16>, vector<8x128xf32> -> vector<8x128xf32>
    %c0_3 = arith.constant 0 : index
    %c0_4 = arith.constant 0 : index
    %4 = vector.load %arg3[%c0_3, %c0_4] : memref<1x128xf32, #tpu.memory_space<vmem>>, vector<1x128xf32>
    %5 = vector.broadcast %4 : vector<1x128xf32> to vector<8x128xf32>
    %6 = arith.addf %3, %5 : vector<8x128xf32>
    %cst_5 = arith.constant 0.000000e+00 : f32
    %7 = vector.broadcast %cst_5 : f32 to vector<8x128xf32>
    %8 = arith.maximumf %6, %7 : vector<8x128xf32>
    %9 = arith.truncf %8 : vector<8x128xf32> to vector<8x128xbf16>
    %c0_6 = arith.constant 0 : index
    %c0_7 = arith.constant 0 : index
    %10 = vector.load %arg4[%c0_6, %c0_7] : memref<128x32xbf16, #tpu.memory_space<vmem>>, vector<128x32xbf16>
    %cst_8 = arith.constant dense<0.000000e+00> : vector<8x32xf32>
    %11 = tpu.matmul %9, %10, %cst_8 {dimension_numbers = #tpu.dot_dimension_numbers<[1], [0], [0], [1], [0, 0, 1, 1], [], []>} : vector<8x128xbf16>, vector<128x32xbf16>, vector<8x32xf32> -> vector<8x32xf32>
    %c0_9 = arith.constant 0 : index
    %c0_10 = arith.constant 0 : index
    %12 = vector.load %arg5[%c0_9, %c0_10] : memref<1x32xf32, #tpu.memory_space<vmem>>, vector<1x32xf32>
    %13 = vector.broadcast %12 : vector<1x32xf32> to vector<8x32xf32>
    %14 = arith.addf %11, %13 : vector<8x32xf32>
    %15 = math.tanh %14 : vector<8x32xf32>
    %cst_11 = arith.constant 1.000000e+00 : f32
    %16 = vector.broadcast %cst_11 : f32 to vector<8x32xf32>
    %17 = arith.addf %16, %15 : vector<8x32xf32>
    %c0_12 = arith.constant 0 : index
    %c0_13 = arith.constant 0 : index
    %18 = vector.load %arg1[%c0_12, %c0_13] : memref<8x32xf32, #tpu.memory_space<vmem>>, vector<8x32xf32>
    %19 = arith.mulf %17, %18 : vector<8x32xf32>
    %c0_14 = arith.constant 0 : index
    %c0_15 = arith.constant 0 : index
    %20 = vector.load %arg6[%c0_14, %c0_15] : memref<8x32xf32, #tpu.memory_space<vmem>>, vector<8x32xf32>
    tpu.vector_store %arg6[%c0_14, %c0_15], %19 {strides = array<i32>} : memref<8x32xf32, #tpu.memory_space<vmem>>, vector<8x32xf32>,
    return
  }
  func.func @transform_0(%arg0: i32) -> (i32, i32) {
    %c0_i32 = arith.constant 0 : i32
    %c0_i32_0 = arith.constant 0 : i32
    return %arg0, %c0_i32 : i32, i32
  }
  func.func @transform_1(%arg0: i32) -> (i32, i32) {
    %c0_i32 = arith.constant 0 : i32
    %c0_i32_0 = arith.constant 0 : i32
    %c0_i32_1 = arith.constant 0 : i32
    return %c0_i32, %c0_i32_0 : i32, i32
  }
  func.func @transform_2(%arg0: i32) -> (i32, i32) {
    %c0_i32 = arith.constant 0 : i32
    %c0_i32_0 = arith.constant 0 : i32
    %c0_i32_1 = arith.constant 0 : i32
    return %c0_i32, %c0_i32_0 : i32, i32
  }
  func.func @transform_3(%arg0: i32) -> (i32, i32) {
    %c0_i32 = arith.constant 0 : i32
    %c0_i32_0 = arith.constant 0 : i32
    %c0_i32_1 = arith.constant 0 : i32
    return %c0_i32, %c0_i32_0 : i32, i32
  }
  func.func @transform_4(%arg0: i32) -> (i32, i32) {
    %c0_i32 = arith.constant 0 : i32
    %c0_i32_0 = arith.constant 0 : i32
    %c0_i32_1 = arith.constant 0 : i32
    return %c0_i32, %c0_i32_0 : i32, i32
  }
  func.func @transform_5(%arg0: i32) -> (i32, i32) {
    %c0_i32 = arith.constant 0 : i32
    %c0_i32_0 = arith.constant 0 : i32
    return %arg0, %c0_i32 : i32, i32
  }
}

</mosaic_0001>

<llo_original>
// kernel: senet_forward.1
$region0: #{senet_forward.1}
  #allocation0 [shape = 'u32[]', space=smem, size = 0x4, offset = 0x4, fixed_abs, tag = 'smem constant byte address 0x4 - core index']
  #allocation1 [shape = 'u32[72,128]{1,0:T(1,128)}', space=vmem, size = 0x9000, scoped, tag = 'internal scratch']
  %s0 = inlined_call_operand.vmem [shape: f32[8,32], index: 0, kind: input, shape index: {}]
  %s1 = inlined_call_operand.vmem [shape: bf16[32,128], index: 1, kind: input, shape index: {}]
  %s2 = inlined_call_operand.vmem [shape: f32[1,128], index: 2, kind: input, shape index: {}]
  %s3 = inlined_call_operand.vmem [shape: bf16[128,32], index: 3, kind: input, shape index: {}]
  %s4 = inlined_call_operand.vmem [shape: f32[1,32], index: 4, kind: input, shape index: {}]
  %s5 = inlined_call_operand.hbm [shape: f32[8,32], index: 5, kind: output, shape index: {}]
  %s6 = sld [smem:[#allocation0]]
  $region30: #{senet_forward.1} parent=0
    _
  %s8 = ssub.s32 1, %s6
  %s9 = scalar_select 0, %s8, %s6
  $region1: #{senet_forward.1} parent=0
    #allocation2 [shape = 'u8[4096]{0}', space=vmem, size = 0x1000, scoped, tag = 'output window, operand 0, single buffered']
    #allocation3 [shape = 's32[1]{0}', space=sflag, size = 0x4, scoped, tag = 'scoped memory for senet_forward.1']
    %10 = vsyncpa [#allocation3], 0
    // Predicated region
    $region2: #{senet_forward.1} parent=1 // pred_check
      _
    $region3: #{senet_forward.1} parent=1 // pred_check_branch
      %12 = sbr.rel (0) target = $region5
    $region4: #{senet_forward.1} parent=1 // pred_region
      _
    $region5: #{senet_forward.1} parent=1 // pred_fallthru
      _
    // Predicated region
    $region6: #{senet_forward.1} parent=1 // pred_check
      _
    $region7: #{senet_forward.1} parent=1 // pred_check_branch
      %14 = sbr.rel (0) target = $region9
    $region8: #{senet_forward.1} parent=1 // pred_region
      _
    $region9: #{senet_forward.1} parent=1 // pred_fallthru
      _
    // Predicated region
    $region10: #{senet_forward.1} parent=1 // pred_check
      _
    $region11: #{senet_forward.1} parent=1 // pred_check_branch
      %16 = sbr.rel (0) target = $region13
    $region12: #{senet_forward.1} parent=1 // pred_region
      _
    $region13: #{senet_forward.1} parent=1 // pred_fallthru
      _
    // Predicated region
    $region14: #{senet_forward.1} parent=1 // pred_check
      _
    $region15: #{senet_forward.1} parent=1 // pred_check_branch
      %18 = sbr.rel (0) target = $region17
    $region16: #{senet_forward.1} parent=1 // pred_region
      _
    $region17: #{senet_forward.1} parent=1 // pred_fallthru
      _
    // Predicated region
    $region18: #{senet_forward.1} parent=1 // pred_check
      _
    $region19: #{senet_forward.1} parent=1 // pred_check_branch
      %20 = sbr.rel (0) target = $region21
    $region20: #{senet_forward.1} parent=1 // pred_region
      _
    $region21: #{senet_forward.1} parent=1 // pred_fallthru
      _
    %v22 = vld [vmem:[%s0] sm:$0xff]
    %v23 = vpack.c.bf16 %v22, %v22
    %v24 = vld [vmem:[%s1] sm:$0xf]
    %v25 = vld [vmem:[%s1 + $0x4] sm:$0xf]
    %v26 = vld [vmem:[%s1 + $0x8] sm:$0xf]
    %v27 = vld [vmem:[%s1 + $0xc] sm:$0xf]
    %v28 = vld [vmem:[%s2] sm:$0x1]
    %v30 = vperm.slane %v28, 0
    %v36 = vunpack.c.l.b16 %v24
    %v37 = vunpack.c.l.b16 %v25
    %v38 = vunpack.c.l.b16 %v26
    %v39 = vunpack.c.l.b16 %v27
    %v40 = vpack.c.b16 %v37, %v36
    %v41 = vpack.c.b16 %v39, %v38
    %vm44 = vcmask 261120
    %v46 = vsel %vm44, %v23, 0
    %48 = vmatpush.bf16.msra.mxu0 0
    %49 = vmatpush.bf16.msra.mxu0 0
    %50 = vmatpush.bf16.msra.mxu0 0
    %51 = vmatpush.bf16.msra.mxu0 0
    %52 = vmatpush.bf16.msra.mxu0 0
    %53 = vmatpush.bf16.msra.mxu0 0
    %54 = vmatpush.bf16.msra.mxu0 %v41
    %55 = vmatpush.bf16.msra.mxu0 %v40
    %56 = vmatmul.bf16.gmra.mxu0 %v46
    %v57 = vpop.f32.mrf.mxu0
    %v58 = vadd.f32 %v30, %v57
    %v59 = vpop.f32.mrf.mxu0
    %60 = vdwg.mxu0
    %v61 = vmax.f32 %v58, 0.0
    %v62 = vpack.c.bf16 %v61, %v61
    %v63 = vld [vmem:[%s3] sm:$0xf]
    %v64 = vld [vmem:[%s3 + $0x4] sm:$0xf]
    %v65 = vld [vmem:[%s3 + $0x8] sm:$0xf]
    %v66 = vld [vmem:[%s3 + $0xc] sm:$0xf]
    %v67 = vld [vmem:[%s3 + $0x10] sm:$0xf]
    %v68 = vld [vmem:[%s3 + $0x14] sm:$0xf]
    %v69 = vld [vmem:[%s3 + $0x18] sm:$0xf]
    %v70 = vld [vmem:[%s3 + $0x1c] sm:$0xf]
    %v71 = vld [vmem:[%s3 + $0x20] sm:$0xf]
    %v72 = vld [vmem:[%s3 + $0x24] sm:$0xf]
    %v73 = vld [vmem:[%s3 + $0x28] sm:$0xf]
    %v74 = vld [vmem:[%s3 + $0x2c] sm:$0xf]
    %v75 = vld [vmem:[%s3 + $0x30] sm:$0xf]
    %v76 = vld [vmem:[%s3 + $0x34] sm:$0xf]
    %v77 = vld [vmem:[%s3 + $0x38] sm:$0xf]
    %v78 = vld [vmem:[%s3 + $0x3c] sm:$0xf]
    %v79 = vld [vmem:[%s4] sm:$0x1]
    %v81 = vperm.slane %v79, 0
    %v99 = vunpack.c.l.b16 %v63
    %v100 = vunpack.c.l.b16 %v64
    %v101 = vunpack.c.l.b16 %v65
    %v102 = vunpack.c.l.b16 %v66
    %v103 = vunpack.c.l.b16 %v67
    %v104 = vunpack.c.l.b16 %v68
    %v105 = vunpack.c.l.b16 %v69
    %v106 = vunpack.c.l.b16 %v70
    %v107 = vunpack.c.l.b16 %v71
    %v108 = vunpack.c.l.b16 %v72
    %v109 = vunpack.c.l.b16 %v73
    %v110 = vunpack.c.l.b16 %v74
    %v111 = vunpack.c.l.b16 %v75
    %v112 = vunpack.c.l.b16 %v76
    %v113 = vunpack.c.l.b16 %v77
    %v114 = vunpack.c.l.b16 %v78
    %v115 = vpack.c.b16 %v100, %v99
    %v116 = vpack.c.b16 %v102, %v101
    %v117 = vpack.c.b16 %v104, %v103
    %v118 = vpack.c.b16 %v106, %v105
    %v119 = vpack.c.b16 %v108, %v107
    %v120 = vpack.c.b16 %v110, %v109
    %v121 = vpack.c.b16 %v112, %v111
    %v122 = vpack.c.b16 %v114, %v113
    %131 = vmatpush.bf16.msra.mxu0 %v122
    %132 = vmatpush.bf16.msra.mxu0 %v121
    %133 = vmatpush.bf16.msra.mxu0 %v120
    %134 = vmatpush.bf16.msra.mxu0 %v119
    %135 = vmatpush.bf16.msra.mxu0 %v118
    %136 = vmatpush.bf16.msra.mxu0 %v117
    %137 = vmatpush.bf16.msra.mxu0 %v116
    %138 = vmatpush.bf16.msra.mxu0 %v115
    %139 = vmatmul.bf16.gmra.mxu0 %v62
    %v140 = vpop.f32.mrf.mxu0
    %v141 = vadd.f32 %v81, %v140
    %v142 = vpop.f32.mrf.mxu0
    %143 = vdwg.mxu0
    %v144 = vtanh.pop %v141
    %v145 = vadd.f32 %v144, 1.0
    %v146 = vmul.f32 %v145, %v22
    %147 = vst.msk [vmem:[#allocation2] sm:$0xff] %vm44, %v146
    // Predicated region
    $region22: #{senet_forward.1} parent=1 // pred_check
      _
    $region23: #{senet_forward.1} parent=1 // pred_check_branch
      %149 = sbr.rel (0) target = $region25
    $region24: #{senet_forward.1} parent=1 // pred_region
      %151 = vsyncadd [#allocation3], 0
      %s153 = sshll.u32 [#allocation2], 4
      %s154 = int_to_ptr.vmem [resolvable:$true] %s153
      %s155 = sshll.u32 %s5, 4
      %s156 = int_to_ptr.hbm [resolvable:$true] %s155
      %158 = dma.vmem_to_hbm [thread:$0]  %s154, 128, %s156, [#allocation3]
    $region25: #{senet_forward.1} parent=1 // pred_fallthru
      _
    // Predicated region
    $region26: #{senet_forward.1} parent=1 // pred_check
      _
    $region27: #{senet_forward.1} parent=1 // pred_check_branch
      %160 = sbr.rel (0) target = $region29
    $region28: #{senet_forward.1} parent=1 // pred_region
      %162 = dma.done [#allocation3], 128
    $region29: #{senet_forward.1} parent=1 // pred_fallthru
      _
    %163 = vsyncpa [#allocation3], 1

</llo_original>
